<compile_context>
chip_gen: v6e
topology: v6e:2x2x1
jax: 0.10.0
libtpu: 0.0.40
codegen_flags: <defaults>
</compile_context>

<pallas_src>
from functools import partial

import jax
import jax.numpy as jnp
import numpy as np
from jax.experimental import pallas as pl
from jax.experimental.pallas import tpu as pltpu


def _next_multiple(n, m):
    return ((n + m - 1) // m) * m


# --------------------------------------------------------------------------- kernel
def _spectral_mul_kernel(a_ref, w_ref, o_ref):
    """Complex channel contraction ('bixy,ioxy->boxy') over pre-expanded slabs.

    a_ref, w_ref : (2, Ci, R, Mp) f32 in VMEM  (R = B*Co rows, index r = b*Co + o)
                   axis 0 = [real, imag]; Ci leading so ref[ri, i] is a contiguous
                   leading-dim load of a dense (R, Mp) tile.
    o_ref        : (2, R, Mp) f32 — one unmasked full-tile store per real/imag slab.
    """
    ci = a_ref.shape[1]

    a_r = a_ref[0, 0]
    a_i = a_ref[1, 0]
    w_r = w_ref[0, 0]
    w_i = w_ref[1, 0]
    # Plain complex MAC (4 mul + 2 add/sub per channel): mul and add share the same
    # VALU slot on TPU, so this beats the 3-multiply trick at B=2, Co=4.
    acc_r = a_r * w_r - a_i * w_i
    acc_i = a_i * w_r + a_r * w_i

    for i in range(1, ci):            # Ci is tiny and static -> fully unrolled
        a_r = a_ref[0, i]
        a_i = a_ref[1, i]
        w_r = w_ref[0, i]
        w_i = w_ref[1, i]
        acc_r = acc_r + (a_r * w_r - a_i * w_i)
        acc_i = acc_i + (a_i * w_r + a_r * w_i)

    o_ref[0] = acc_r
    o_ref[1] = acc_i


def spectral_mul_pallas(a, w):
    """a, w: (2, Ci, R, Mp) float32  ->  (2, R, Mp) float32."""
    _, _, R, Mp = a.shape
    return pl.pallas_call(
        _spectral_mul_kernel,
        out_shape=jax.ShapeDtypeStruct((2, R, Mp), jnp.float32),
        # Single invocation (no grid): whole (tiny) operands live in VMEM.
        in_specs=[
            pl.BlockSpec(memory_space=pltpu.MemorySpace.VMEM),
            pl.BlockSpec(memory_space=pltpu.MemorySpace.VMEM),
        ],
        out_specs=pl.BlockSpec(memory_space=pltpu.MemorySpace.VMEM),
    )(a, w)


# -------------------------------------------------------------- one-time weight pack
def pack_spectral_weights(weights1, weights2, batch_size, lane=128):
    """Parameter-only packing, done ONCE at setup (re-run only if batch size changes).

    weights1/weights2: (Ci, Co, m1, m2, 2) as in the PyTorch module.
    Returns (2, Ci, batch_size*Co, Mp) float32 with row r = b*Co + o holding
    weight[i, o] for the fused (corner1 ++ corner2) mode axis, zero-padded to Mp.
    """
    Ci, Co, m1, m2, _ = weights1.shape
    M1 = m1 * m2
    M = 2 * M1
    Mp = _next_multiple(M, lane)

    w = jnp.concatenate(
        [weights1.reshape(Ci, Co, M1, 2), weights2.reshape(Ci, Co, M1, 2)], axis=2
    )                                                           # (Ci, Co, M, 2)
    w_ri = jnp.moveaxis(w, -1, 0).astype(jnp.float32)           # (2, Ci, Co, M)
    # Broadcast over batch rows so out-row r = b*Co + o sees w[:, i, o, :].
    w_exp = jnp.broadcast_to(
        w_ri[:, :, None, :, :], (2, Ci, batch_size, Co, M)
    ).reshape(2, Ci, batch_size * Co, M)
    if Mp > M:
        w_exp = jnp.pad(w_exp, ((0, 0), (0, 0), (0, 0), (0, Mp - M)))
    return w_exp


# ------------------------------------------------------------------------- forward
@partial(jax.jit, static_argnames=("modes1", "modes2"))
def spectral_conv2d(x, w_packed, modes1, modes2):
    """Forward pass of SpectralConv2d.

    x        : (B, Ci, H, W) float32 (NCHW)
    w_packed : output of pack_spectral_weights (built once, outside the forward)
    """
    B, Ci, H, W = x.shape
    Wf = W // 2 + 1
    R = w_packed.shape[2]
    Co = R // B
    Mp = w_packed.shape[3]
    M1 = modes1 * modes2
    M = 2 * M1
    assert 2 * modes1 <= H and modes2 <= Wf, "corner mode blocks must not overlap/clip"
    assert R == B * Co and Mp >= M, "w_packed was built for a different batch size"

    # torch.rfft(x, 2, normalized=True, onesided=True) == rfft2 with ortho norm.
    x_ft = jnp.fft.rfft2(x, norm="ortho")                       # (B, Ci, H, Wf) c64

    # Fuse the two frequency corners along one flattened mode axis.
    a1 = x_ft[:, :, :modes1, :modes2].reshape(B, Ci, M1)        # low-frequency rows
    a2 = x_ft[:, :, H - modes1:, :modes2].reshape(B, Ci, M1)    # high-frequency rows
    a = jnp.concatenate([a1, a2], axis=-1)                      # (B, Ci, M) complex64

    # Pack real/imag, put Ci leading, broadcast over Co (row r = b*Co + o), pad lanes.
    a_ri = jnp.stack([a.real, a.imag], axis=0).astype(jnp.float32)   # (2, B, Ci, M)
    a_ri = jnp.transpose(a_ri, (0, 2, 1, 3))                         # (2, Ci, B, M)
    a_exp = jnp.broadcast_to(
        a_ri[:, :, :, None, :], (2, Ci, B, Co, M)
    ).reshape(2, Ci, R, M)
    if Mp > M:
        a_exp = jnp.pad(a_exp, ((0, 0), (0, 0), (0, 0), (0, Mp - M)))

    out = spectral_mul_pallas(a_exp, w_packed)                  # (2, R, Mp)

    out = out[:, :, :M].reshape(2, B, Co, 2, modes1, modes2)    # split rows & corners
    out_c = (out[0] + 1j * out[1]).astype(jnp.complex64)        # (B, Co, 2, m1, m2)

    out_ft = jnp.zeros((B, Co, H, Wf), dtype=jnp.complex64)
    out_ft = out_ft.at[:, :, :modes1, :modes2].set(out_c[:, :, 0])
    out_ft = out_ft.at[:, :, H - modes1:, :modes2].set(out_c[:, :, 1])

    # torch.irfft(..., normalized=True, onesided=True, signal_sizes=(H, W))
    return jnp.fft.irfft2(out_ft, s=(H, W), norm="ortho")


# ------------------------------------------------------------------------ reference
def _reference_forward(x, weights1, weights2, modes1, modes2):
    """Pure-JAX reference mirroring the PyTorch forward (for correctness check)."""
    B, Ci, H, W = x.shape
    Co = weights1.shape[1]
    Wf = W // 2 + 1
    x_ft = jnp.fft.rfft2(x, norm="ortho")
    w1c = weights1[..., 0] + 1j * weights1[..., 1]
    w2c = weights2[..., 0] + 1j * weights2[..., 1]
    out_ft = jnp.zeros((B, Co, H, Wf), dtype=jnp.complex64)
    out_ft = out_ft.at[:, :, :modes1, :modes2].set(
        jnp.einsum("bixy,ioxy->boxy", x_ft[:, :, :modes1, :modes2], w1c))
    out_ft = out_ft.at[:, :, H - modes1:, :modes2].set(
        jnp.einsum("bixy,ioxy->boxy", x_ft[:, :, H - modes1:, :modes2], w2c))
    return jnp.fft.irfft2(out_ft, s=(H, W), norm="ortho")


if __name__ == "__main__":
    B, C, H, W = 2, 4, 16, 16          # in_channels == out_channels == C
    m1 = m2 = 6                        # modes (2*m1 <= H, m2 <= W//2 + 1)

    key = jax.random.PRNGKey(0)
    kx, k1, k2 = jax.random.split(key, 3)
    scale = 1.0 / (C * C)
    x = jax.random.normal(kx, (B, C, H, W), dtype=jnp.float32)
    # weights ~ scale * U[0,1), shapes (in, out, m1, m2, 2) as in the module.
    w1 = scale * jax.random.uniform(k1, (C, C, m1, m2, 2), dtype=jnp.float32)
    w2 = scale * jax.random.uniform(k2, (C, C, m1, m2, 2), dtype=jnp.float32)

    # Parameter-only packing, hoisted out of the forward (done once at setup).
    w_packed = jax.block_until_ready(pack_spectral_weights(w1, w2, B))

    out = jax.block_until_ready(spectral_conv2d(x, w_packed, m1, m2))
    ref = jax.block_until_ready(_reference_forward(x, w1, w2, m1, m2))

    assert out.shape == (B, C, H, W), out.shape
    np.testing.assert_allclose(np.asarray(out), np.asarray(ref), rtol=1e-4, atol=1e-5)
    print("KERNEL_OK")
</pallas_src>

<mosaic_0001>
module attributes {stable_mosaic.version = 11 : i64} {
  func.func @_spectral_mul_kernel(%arg0: memref<2x4x8x128xf32, #tpu.memory_space<vmem>>, %arg1: memref<2x4x8x128xf32, #tpu.memory_space<vmem>>, %arg2: memref<2x8x128xf32, #tpu.memory_space<vmem>>) attributes {dimension_semantics = [], scalar_prefetch = 0 : i64, scratch_operands = 0 : i64, tpu.core_type = #tpu.core_type<tc>} {
    %c0 = arith.constant 0 : index
    %c0_0 = arith.constant 0 : index
    %c0_1 = arith.constant 0 : index
    %c0_2 = arith.constant 0 : index
    %0 = vector.load %arg0[%c0, %c0_0, %c0_1, %c0_2] : memref<2x4x8x128xf32, #tpu.memory_space<vmem>>, vector<1x1x8x128xf32>
    %1 = vector.shape_cast %0 : vector<1x1x8x128xf32> to vector<8x128xf32>
    %c1 = arith.constant 1 : index
    %c0_3 = arith.constant 0 : index
    %c0_4 = arith.constant 0 : index
    %c0_5 = arith.constant 0 : index
    %2 = vector.load %arg0[%c1, %c0_3, %c0_4, %c0_5] : memref<2x4x8x128xf32, #tpu.memory_space<vmem>>, vector<1x1x8x128xf32>
    %3 = vector.shape_cast %2 : vector<1x1x8x128xf32> to vector<8x128xf32>
    %c0_6 = arith.constant 0 : index
    %c0_7 = arith.constant 0 : index
    %c0_8 = arith.constant 0 : index
    %c0_9 = arith.constant 0 : index
    %4 = vector.load %arg1[%c0_6, %c0_7, %c0_8, %c0_9] : memref<2x4x8x128xf32, #tpu.memory_space<vmem>>, vector<1x1x8x128xf32>
    %5 = vector.shape_cast %4 : vector<1x1x8x128xf32> to vector<8x128xf32>
    %c1_10 = arith.constant 1 : index
    %c0_11 = arith.constant 0 : index
    %c0_12 = arith.constant 0 : index
    %c0_13 = arith.constant 0 : index
    %6 = vector.load %arg1[%c1_10, %c0_11, %c0_12, %c0_13] : memref<2x4x8x128xf32, #tpu.memory_space<vmem>>, vector<1x1x8x128xf32>
    %7 = vector.shape_cast %6 : vector<1x1x8x128xf32> to vector<8x128xf32>
    %8 = arith.mulf %1, %5 : vector<8x128xf32>
    %9 = arith.mulf %3, %7 : vector<8x128xf32>
    %10 = arith.subf %8, %9 : vector<8x128xf32>
    %11 = arith.mulf %3, %5 : vector<8x128xf32>
    %12 = arith.mulf %1, %7 : vector<8x128xf32>
    %13 = arith.addf %11, %12 : vector<8x128xf32>
    %c0_14 = arith.constant 0 : index
    %c1_15 = arith.constant 1 : index
    %c0_16 = arith.constant 0 : index
    %c0_17 = arith.constant 0 : index
    %14 = vector.load %arg0[%c0_14, %c1_15, %c0_16, %c0_17] : memref<2x4x8x128xf32, #tpu.memory_space<vmem>>, vector<1x1x8x128xf32>
    %15 = vector.shape_cast %14 : vector<1x1x8x128xf32> to vector<8x128xf32>
    %c1_18 = arith.constant 1 : index
    %c1_19 = arith.constant 1 : index
    %c0_20 = arith.constant 0 : index
    %c0_21 = arith.constant 0 : index
    %16 = vector.load %arg0[%c1_18, %c1_19, %c0_20, %c0_21] : memref<2x4x8x128xf32, #tpu.memory_space<vmem>>, vector<1x1x8x128xf32>
    %17 = vector.shape_cast %16 : vector<1x1x8x128xf32> to vector<8x128xf32>
    %c0_22 = arith.constant 0 : index
    %c1_23 = arith.constant 1 : index
    %c0_24 = arith.constant 0 : index
    %c0_25 = arith.constant 0 : index
    %18 = vector.load %arg1[%c0_22, %c1_23, %c0_24, %c0_25] : memref<2x4x8x128xf32, #tpu.memory_space<vmem>>, vector<1x1x8x128xf32>
    %19 = vector.shape_cast %18 : vector<1x1x8x128xf32> to vector<8x128xf32>
    %c1_26 = arith.constant 1 : index
    %c1_27 = arith.constant 1 : index
    %c0_28 = arith.constant 0 : index
    %c0_29 = arith.constant 0 : index
    %20 = vector.load %arg1[%c1_26, %c1_27, %c0_28, %c0_29] : memref<2x4x8x128xf32, #tpu.memory_space<vmem>>, vector<1x1x8x128xf32>
    %21 = vector.shape_cast %20 : vector<1x1x8x128xf32> to vector<8x128xf32>
    %22 = arith.mulf %15, %19 : vector<8x128xf32>
    %23 = arith.mulf %17, %21 : vector<8x128xf32>
    %24 = arith.subf %22, %23 : vector<8x128xf32>
    %25 = arith.addf %10, %24 : vector<8x128xf32>
    %26 = arith.mulf %17, %19 : vector<8x128xf32>
    %27 = arith.mulf %15, %21 : vector<8x128xf32>
    %28 = arith.addf %26, %27 : vector<8x128xf32>
    %29 = arith.addf %13, %28 : vector<8x128xf32>
    %c0_30 = arith.constant 0 : index
    %c2 = arith.constant 2 : index
    %c0_31 = arith.constant 0 : index
    %c0_32 = arith.constant 0 : index
    %30 = vector.load %arg0[%c0_30, %c2, %c0_31, %c0_32] : memref<2x4x8x128xf32, #tpu.memory_space<vmem>>, vector<1x1x8x128xf32>
    %31 = vector.shape_cast %30 : vector<1x1x8x128xf32> to vector<8x128xf32>
    %c1_33 = arith.constant 1 : index
    %c2_34 = arith.constant 2 : index
    %c0_35 = arith.constant 0 : index
    %c0_36 = arith.constant 0 : index
    %32 = vector.load %arg0[%c1_33, %c2_34, %c0_35, %c0_36] : memref<2x4x8x128xf32, #tpu.memory_space<vmem>>, vector<1x1x8x128xf32>
    %33 = vector.shape_cast %32 : vector<1x1x8x128xf32> to vector<8x128xf32>
    %c0_37 = arith.constant 0 : index
    %c2_38 = arith.constant 2 : index
    %c0_39 = arith.constant 0 : index
    %c0_40 = arith.constant 0 : index
    %34 = vector.load %arg1[%c0_37, %c2_38, %c0_39, %c0_40] : memref<2x4x8x128xf32, #tpu.memory_space<vmem>>, vector<1x1x8x128xf32>
    %35 = vector.shape_cast %34 : vector<1x1x8x128xf32> to vector<8x128xf32>
    %c1_41 = arith.constant 1 : index
    %c2_42 = arith.constant 2 : index
    %c0_43 = arith.constant 0 : index
    %c0_44 = arith.constant 0 : index
    %36 = vector.load %arg1[%c1_41, %c2_42, %c0_43, %c0_44] : memref<2x4x8x128xf32, #tpu.memory_space<vmem>>, vector<1x1x8x128xf32>
    %37 = vector.shape_cast %36 : vector<1x1x8x128xf32> to vector<8x128xf32>
    %38 = arith.mulf %31, %35 : vector<8x128xf32>
    %39 = arith.mulf %33, %37 : vector<8x128xf32>
    %40 = arith.subf %38, %39 : vector<8x128xf32>
    %41 = arith.addf %25, %40 : vector<8x128xf32>
    %42 = arith.mulf %33, %35 : vector<8x128xf32>
    %43 = arith.mulf %31, %37 : vector<8x128xf32>
    %44 = arith.addf %42, %43 : vector<8x128xf32>
    %45 = arith.addf %29, %44 : vector<8x128xf32>
    %c0_45 = arith.constant 0 : index
    %c3 = arith.constant 3 : index
    %c0_46 = arith.constant 0 : index
    %c0_47 = arith.constant 0 : index
    %46 = vector.load %arg0[%c0_45, %c3, %c0_46, %c0_47] : memref<2x4x8x128xf32, #tpu.memory_space<vmem>>, vector<1x1x8x128xf32>
    %47 = vector.shape_cast %46 : vector<1x1x8x128xf32> to vector<8x128xf32>
    %c1_48 = arith.constant 1 : index
    %c3_49 = arith.constant 3 : index
    %c0_50 = arith.constant 0 : index
    %c0_51 = arith.constant 0 : index
    %48 = vector.load %arg0[%c1_48, %c3_49, %c0_50, %c0_51] : memref<2x4x8x128xf32, #tpu.memory_space<vmem>>, vector<1x1x8x128xf32>
    %49 = vector.shape_cast %48 : vector<1x1x8x128xf32> to vector<8x128xf32>
    %c0_52 = arith.constant 0 : index
    %c3_53 = arith.constant 3 : index
    %c0_54 = arith.constant 0 : index
    %c0_55 = arith.constant 0 : index
    %50 = vector.load %arg1[%c0_52, %c3_53, %c0_54, %c0_55] : memref<2x4x8x128xf32, #tpu.memory_space<vmem>>, vector<1x1x8x128xf32>
    %51 = vector.shape_cast %50 : vector<1x1x8x128xf32> to vector<8x128xf32>
    %c1_56 = arith.constant 1 : index
    %c3_57 = arith.constant 3 : index
    %c0_58 = arith.constant 0 : index
    %c0_59 = arith.constant 0 : index
    %52 = vector.load %arg1[%c1_56, %c3_57, %c0_58, %c0_59] : memref<2x4x8x128xf32, #tpu.memory_space<vmem>>, vector<1x1x8x128xf32>
    %53 = vector.shape_cast %52 : vector<1x1x8x128xf32> to vector<8x128xf32>
    %54 = arith.mulf %47, %51 : vector<8x128xf32>
    %55 = arith.mulf %49, %53 : vector<8x128xf32>
    %56 = arith.subf %54, %55 : vector<8x128xf32>
    %57 = arith.addf %41, %56 : vector<8x128xf32>
    %58 = arith.mulf %49, %51 : vector<8x128xf32>
    %59 = arith.mulf %47, %53 : vector<8x128xf32>
    %60 = arith.addf %58, %59 : vector<8x128xf32>
    %61 = arith.addf %45, %60 : vector<8x128xf32>
    %c0_60 = arith.constant 0 : index
    %c0_61 = arith.constant 0 : index
    %c0_62 = arith.constant 0 : index
    %62 = vector.load %arg2[%c0_60, %c0_61, %c0_62] : memref<2x8x128xf32, #tpu.memory_space<vmem>>, vector<1x8x128xf32>
    %63 = vector.shape_cast %62 : vector<1x8x128xf32> to vector<8x128xf32>
    %64 = vector.shape_cast %57 : vector<8x128xf32> to vector<1x8x128xf32>
    tpu.vector_store %arg2[%c0_60, %c0_61, %c0_62], %64 {strides = array<i32>} : memref<2x8x128xf32, #tpu.memory_space<vmem>>, vector<1x8x128xf32>,
    %c1_63 = arith.constant 1 : index
    %c0_64 = arith.constant 0 : index
    %c0_65 = arith.constant 0 : index
    %65 = vector.load %arg2[%c1_63, %c0_64, %c0_65] : memref<2x8x128xf32, #tpu.memory_space<vmem>>, vector<1x8x128xf32>
    %66 = vector.shape_cast %65 : vector<1x8x128xf32> to vector<8x128xf32>
    %67 = vector.shape_cast %61 : vector<8x128xf32> to vector<1x8x128xf32>
    tpu.vector_store %arg2[%c1_63, %c0_64, %c0_65], %67 {strides = array<i32>} : memref<2x8x128xf32, #tpu.memory_space<vmem>>, vector<1x8x128xf32>,
    return
  }
}

</mosaic_0001>

<llo_original>
// kernel: squeeze.4
$region0: #{squeeze.4}
  %s0 = inlined_call_operand.vmem [shape: f32[1,8,72], index: 0, kind: input, shape index: {}]
  %s1 = inlined_call_operand.vmem [shape: f32[2,4,2,6,6], index: 1, kind: output, shape index: {}]
  %v2 = vld [vmem:[%s0] sm:$0xff]
  %vm3 = vcmask 48128
  %4 = vst.msk [vmem:[%s1] ss:$16 sm:$0x3] %vm3, %v2
  %5 = vst.msk [vmem:[%s1] ss:$16 sm:$0xc] %vm3, %v2
  %6 = vst.msk [vmem:[%s1] ss:$16 sm:$0x30] %vm3, %v2
  %7 = vst.msk [vmem:[%s1] ss:$16 sm:$0xc0] %vm3, %v2
  %v8 = vld [vmem:[%s0] sm:$0xff]
  %9 = vrot.lane.b32.xlu0 %v8, 122
  %v10 = vpop.permute.xlu0 %9
  %vm11 = vcmask 48128
  %s12 = scalar_lea.vmem %s1, 1
  %13 = vst.msk [vmem:[%s12] ss:$16 sm:$0x3] %vm11, %v10
  %s14 = scalar_lea.vmem %s1, 1
  %15 = vst.msk [vmem:[%s14] ss:$16 sm:$0xc] %vm11, %v10
  %s16 = scalar_lea.vmem %s1, 1
  %17 = vst.msk [vmem:[%s16] ss:$16 sm:$0x30] %vm11, %v10
  %s18 = scalar_lea.vmem %s1, 1
  %19 = vst.msk [vmem:[%s18] ss:$16 sm:$0xc0] %vm11, %v10
  %v20 = vld [vmem:[%s0] sm:$0xff]
  %21 = vrot.lane.b32.xlu0 %v20, 116
  %v22 = vpop.permute.xlu0 %21
  %vm23 = vcmask 48128
  %s24 = scalar_lea.vmem %s1, 2
  %25 = vst.msk [vmem:[%s24] ss:$16 sm:$0x3] %vm23, %v22
  %s26 = scalar_lea.vmem %s1, 2
  %27 = vst.msk [vmem:[%s26] ss:$16 sm:$0xc] %vm23, %v22
  %s28 = scalar_lea.vmem %s1, 2
  %29 = vst.msk [vmem:[%s28] ss:$16 sm:$0x30] %vm23, %v22
  %s30 = scalar_lea.vmem %s1, 2
  %31 = vst.msk [vmem:[%s30] ss:$16 sm:$0xc0] %vm23, %v22
  %v32 = vld [vmem:[%s0] sm:$0xff]
  %33 = vrot.lane.b32.xlu0 %v32, 110
  %v34 = vpop.permute.xlu0 %33
  %vm35 = vcmask 48128
  %s36 = scalar_lea.vmem %s1, 3
  %37 = vst.msk [vmem:[%s36] ss:$16 sm:$0x3] %vm35, %v34
  %s38 = scalar_lea.vmem %s1, 3
  %39 = vst.msk [vmem:[%s38] ss:$16 sm:$0xc] %vm35, %v34
  %s40 = scalar_lea.vmem %s1, 3
  %41 = vst.msk [vmem:[%s40] ss:$16 sm:$0x30] %vm35, %v34
  %s42 = scalar_lea.vmem %s1, 3
  %43 = vst.msk [vmem:[%s42] ss:$16 sm:$0xc0] %vm35, %v34
  %v44 = vld [vmem:[%s0] sm:$0xff]
  %45 = vrot.lane.b32.xlu0 %v44, 104
  %v46 = vpop.permute.xlu0 %45
  %vm47 = vcmask 48128
  %s48 = scalar_lea.vmem %s1, 4
  %49 = vst.msk [vmem:[%s48] ss:$16 sm:$0x3] %vm47, %v46
  %s50 = scalar_lea.vmem %s1, 4
  %51 = vst.msk [vmem:[%s50] ss:$16 sm:$0xc] %vm47, %v46
  %s52 = scalar_lea.vmem %s1, 4
  %53 = vst.msk [vmem:[%s52] ss:$16 sm:$0x30] %vm47, %v46
  %s54 = scalar_lea.vmem %s1, 4
  %55 = vst.msk [vmem:[%s54] ss:$16 sm:$0xc0] %vm47, %v46
  %v56 = vld [vmem:[%s0] sm:$0xff]
  %57 = vrot.lane.b32.xlu0 %v56, 98
  %v58 = vpop.permute.xlu0 %57
  %vm59 = vcmask 48128
  %s60 = scalar_lea.vmem %s1, 5
  %61 = vst.msk [vmem:[%s60] ss:$16 sm:$0x3] %vm59, %v58
  %s62 = scalar_lea.vmem %s1, 5
  %63 = vst.msk [vmem:[%s62] ss:$16 sm:$0xc] %vm59, %v58
  %s64 = scalar_lea.vmem %s1, 5
  %65 = vst.msk [vmem:[%s64] ss:$16 sm:$0x30] %vm59, %v58
  %s66 = scalar_lea.vmem %s1, 5
  %67 = vst.msk [vmem:[%s66] ss:$16 sm:$0xc0] %vm59, %v58
  %v68 = vld [vmem:[%s0] sm:$0xff]
  %69 = vrot.lane.b32.xlu0 %v68, 92
  %v70 = vpop.permute.xlu0 %69
  %vm71 = vcmask 48128
  %s72 = scalar_lea.vmem %s1, 8
  %73 = vst.msk [vmem:[%s72] ss:$16 sm:$0x3] %vm71, %v70
  %s74 = scalar_lea.vmem %s1, 8
  %75 = vst.msk [vmem:[%s74] ss:$16 sm:$0xc] %vm71, %v70
  %s76 = scalar_lea.vmem %s1, 8
  %77 = vst.msk [vmem:[%s76] ss:$16 sm:$0x30] %vm71, %v70
  %s78 = scalar_lea.vmem %s1, 8
  %79 = vst.msk [vmem:[%s78] ss:$16 sm:$0xc0] %vm71, %v70
  %v80 = vld [vmem:[%s0] sm:$0xff]
  %81 = vrot.lane.b32.xlu0 %v80, 86
  %v82 = vpop.permute.xlu0 %81
  %vm83 = vcmask 48128
  %s84 = scalar_lea.vmem %s1, 9
  %85 = vst.msk [vmem:[%s84] ss:$16 sm:$0x3] %vm83, %v82
  %s86 = scalar_lea.vmem %s1, 9
  %87 = vst.msk [vmem:[%s86] ss:$16 sm:$0xc] %vm83, %v82
  %s88 = scalar_lea.vmem %s1, 9
  %89 = vst.msk [vmem:[%s88] ss:$16 sm:$0x30] %vm83, %v82
  %s90 = scalar_lea.vmem %s1, 9
  %91 = vst.msk [vmem:[%s90] ss:$16 sm:$0xc0] %vm83, %v82
  %v92 = vld [vmem:[%s0] sm:$0xff]
  %93 = vrot.lane.b32.xlu0 %v92, 80
  %v94 = vpop.permute.xlu0 %93
  %vm95 = vcmask 48128
  %s96 = scalar_lea.vmem %s1, 10
  %97 = vst.msk [vmem:[%s96] ss:$16 sm:$0x3] %vm95, %v94
  %s98 = scalar_lea.vmem %s1, 10
  %99 = vst.msk [vmem:[%s98] ss:$16 sm:$0xc] %vm95, %v94
  %s100 = scalar_lea.vmem %s1, 10
  %101 = vst.msk [vmem:[%s100] ss:$16 sm:$0x30] %vm95, %v94
  %s102 = scalar_lea.vmem %s1, 10
  %103 = vst.msk [vmem:[%s102] ss:$16 sm:$0xc0] %vm95, %v94
  %v104 = vld [vmem:[%s0] sm:$0xff]
  %105 = vrot.lane.b32.xlu0 %v104, 74
  %v106 = vpop.permute.xlu0 %105
  %vm107 = vcmask 48128
  %s108 = scalar_lea.vmem %s1, 11
  %109 = vst.msk [vmem:[%s108] ss:$16 sm:$0x3] %vm107, %v106
  %s110 = scalar_lea.vmem %s1, 11
  %111 = vst.msk [vmem:[%s110] ss:$16 sm:$0xc] %vm107, %v106
  %s112 = scalar_lea.vmem %s1, 11
  %113 = vst.msk [vmem:[%s112] ss:$16 sm:$0x30] %vm107, %v106
  %s114 = scalar_lea.vmem %s1, 11
  %115 = vst.msk [vmem:[%s114] ss:$16 sm:$0xc0] %vm107, %v106
  %v116 = vld [vmem:[%s0] sm:$0xff]
  %117 = vrot.lane.b32.xlu0 %v116, 68
  %v118 = vpop.permute.xlu0 %117
  %vm119 = vcmask 48128
  %s120 = scalar_lea.vmem %s1, 12
  %121 = vst.msk [vmem:[%s120] ss:$16 sm:$0x3] %vm119, %v118
  %s122 = scalar_lea.vmem %s1, 12
  %123 = vst.msk [vmem:[%s122] ss:$16 sm:$0xc] %vm119, %v118
  %s124 = scalar_lea.vmem %s1, 12
  %125 = vst.msk [vmem:[%s124] ss:$16 sm:$0x30] %vm119, %v118
  %s126 = scalar_lea.vmem %s1, 12
  %127 = vst.msk [vmem:[%s126] ss:$16 sm:$0xc0] %vm119, %v118
  %v128 = vld [vmem:[%s0] sm:$0xff]
  %129 = vrot.lane.b32.xlu0 %v128, 62
  %v130 = vpop.permute.xlu0 %129
  %vm131 = vcmask 48128
  %s132 = scalar_lea.vmem %s1, 13
  %133 = vst.msk [vmem:[%s132] ss:$16 sm:$0x3] %vm131, %v130
  %s134 = scalar_lea.vmem %s1, 13
  %135 = vst.msk [vmem:[%s134] ss:$16 sm:$0xc] %vm131, %v130
  %s136 = scalar_lea.vmem %s1, 13
  %137 = vst.msk [vmem:[%s136] ss:$16 sm:$0x30] %vm131, %v130
  %s138 = scalar_lea.vmem %s1, 13
  %139 = vst.msk [vmem:[%s138] ss:$16 sm:$0xc0] %vm131, %v130

// kernel: spectral_conv2d.1
$region0: #{spectral_conv2d.1}
  #allocation0 [shape = 'u32[]', space=smem, size = 0x4, offset = 0x4, fixed_abs, tag = 'smem constant byte address 0x4 - core index']
  #allocation1 [shape = 'u32[144,128]{1,0:T(1,128)}', space=vmem, size = 0x12000, scoped, tag = 'internal scratch']
  %s0 = inlined_call_operand.vmem [shape: f32[2,4,8,128], index: 0, kind: input, shape index: {}]
  %s1 = inlined_call_operand.vmem [shape: f32[2,4,8,128], index: 1, kind: input, shape index: {}]
  %s2 = inlined_call_operand.vmem [shape: f32[2,8,128], index: 2, kind: output, shape index: {}]
  %s3 = sld [smem:[#allocation0]]
  $region18: #{spectral_conv2d.1} parent=0
    _
  %s5 = ssub.s32 1, %s3
  %s6 = scalar_select 0, %s5, %s3
  // Predicated region
  $region2: #{spectral_conv2d.1} parent=0 // pred_check
    _
  $region3: #{spectral_conv2d.1} parent=0 // pred_check_branch
    %8 = sbr.rel (0) target = $region5
  $region4: #{spectral_conv2d.1} parent=0 // pred_region
    _
  $region5: #{spectral_conv2d.1} parent=0 // pred_fallthru
    _
  // Predicated region
  $region6: #{spectral_conv2d.1} parent=0 // pred_check
    _
  $region7: #{spectral_conv2d.1} parent=0 // pred_check_branch
    %10 = sbr.rel (0) target = $region9
  $region8: #{spectral_conv2d.1} parent=0 // pred_region
    _
  $region9: #{spectral_conv2d.1} parent=0 // pred_fallthru
    _
  %v11 = vld [vmem:[%s0] sm:$0xff]
  %s12 = scalar_lea.vmem %s0, 32
  %v13 = vld [vmem:[%s12] sm:$0xff]
  %v14 = vld [vmem:[%s1] sm:$0xff]
  %s15 = scalar_lea.vmem %s1, 32
  %v16 = vld [vmem:[%s15] sm:$0xff]
  %v17 = vmul.f32 %v11, %v14
  %v18 = vmul.f32 %v13, %v16
  %v19 = vsub.f32 %v17, %v18
  %v20 = vmul.f32 %v13, %v14
  %v21 = vmul.f32 %v11, %v16
  %v22 = vadd.f32 %v20, %v21
  %s23 = scalar_lea.vmem %s0, 8
  %v24 = vld [vmem:[%s23] sm:$0xff]
  %s25 = scalar_lea.vmem %s0, 40
  %v26 = vld [vmem:[%s25] sm:$0xff]
  %s27 = scalar_lea.vmem %s1, 8
  %v28 = vld [vmem:[%s27] sm:$0xff]
  %s29 = scalar_lea.vmem %s1, 40
  %v30 = vld [vmem:[%s29] sm:$0xff]
  %v31 = vmul.f32 %v24, %v28
  %v32 = vmul.f32 %v26, %v30
  %v33 = vsub.f32 %v31, %v32
  %v34 = vadd.f32 %v19, %v33
  %v35 = vmul.f32 %v26, %v28
  %v36 = vmul.f32 %v24, %v30
  %v37 = vadd.f32 %v35, %v36
  %v38 = vadd.f32 %v22, %v37
  %s39 = scalar_lea.vmem %s0, 16
  %v40 = vld [vmem:[%s39] sm:$0xff]
  %s41 = scalar_lea.vmem %s0, 48
  %v42 = vld [vmem:[%s41] sm:$0xff]
  %s43 = scalar_lea.vmem %s1, 16
  %v44 = vld [vmem:[%s43] sm:$0xff]
  %s45 = scalar_lea.vmem %s1, 48
  %v46 = vld [vmem:[%s45] sm:$0xff]
  %v47 = vmul.f32 %v40, %v44
  %v48 = vmul.f32 %v42, %v46
  %v49 = vsub.f32 %v47, %v48
  %v50 = vadd.f32 %v34, %v49
  %v51 = vmul.f32 %v42, %v44
  %v52 = vmul.f32 %v40, %v46
  %v53 = vadd.f32 %v51, %v52
  %v54 = vadd.f32 %v38, %v53
  %s55 = scalar_lea.vmem %s0, 24
  %v56 = vld [vmem:[%s55] sm:$0xff]
  %s57 = scalar_lea.vmem %s0, 56
  %v58 = vld [vmem:[%s57] sm:$0xff]
  %s59 = scalar_lea.vmem %s1, 24
  %v60 = vld [vmem:[%s59] sm:$0xff]
  %s61 = scalar_lea.vmem %s1, 56
  %v62 = vld [vmem:[%s61] sm:$0xff]
  %v63 = vmul.f32 %v56, %v60
  %v64 = vmul.f32 %v58, %v62
  %v65 = vsub.f32 %v63, %v64
  %v66 = vadd.f32 %v50, %v65
  %v67 = vmul.f32 %v58, %v60
  %v68 = vmul.f32 %v56, %v62
  %v69 = vadd.f32 %v67, %v68
  %v70 = vadd.f32 %v54, %v69
  %71 = vst [vmem:[%s2] sm:$0xff] %v66
  %s72 = scalar_lea.vmem %s2, 8
  %73 = vst [vmem:[%s72] sm:$0xff] %v70
  // Predicated region
  $region10: #{spectral_conv2d.1} parent=0 // pred_check
    _
  $region11: #{spectral_conv2d.1} parent=0 // pred_check_branch
    %75 = sbr.rel (0) target = $region13
  $region12: #{spectral_conv2d.1} parent=0 // pred_region
    _
  $region13: #{spectral_conv2d.1} parent=0 // pred_fallthru
    _
  // Predicated region
  $region14: #{spectral_conv2d.1} parent=0 // pred_check
    _
  $region15: #{spectral_conv2d.1} parent=0 // pred_check_branch
    %77 = sbr.rel (0) target = $region17
  $region16: #{spectral_conv2d.1} parent=0 // pred_region
    _
  $region17: #{spectral_conv2d.1} parent=0 // pred_fallthru
    _

// kernel: reverse.1
$region0: #{reverse.1}
  %s0 = inlined_call_operand.vmem [shape: f32[2,4,16,7], index: 0, kind: input, shape index: {}]
  %s1 = inlined_call_operand.vmem [shape: f32[2,4,16,7], index: 1, kind: output, shape index: {}]
  $region1: #{reverse.1} parent=0
    #allocation0 [shape = 'u8[65536]{0}', space=vmem, size = 0x10000, scoped, tag = 'operand span for operand 0']
    #allocation1 [shape = 'u8[32768]{0}', space=vmem, size = 0x8000, scoped, tag = 'operand span for operand 1']
    %s2 = scalar_lea.vmem [#allocation0], 8
    // Predicated region
    $region2: #{reverse.1} parent=1 // pred_check
      _
    $region3: #{reverse.1} parent=1 // pred_check_branch
      %4 = sbr.rel (0) target = $region5
    $region4: #{reverse.1} parent=1 // pred_region
      // Predicated region
      $region6: #{reverse.1} parent=4 // pred_check
        _
      $region7: #{reverse.1} parent=4 // pred_check_branch
        %6 = sbr.rel (0) target = $region9
      $region8: #{reverse.1} parent=4 // pred_region
        // Predicated region
        $region21: #{reverse.1} parent=8 // pred_check
          _
        $region22: #{reverse.1} parent=8 // pred_check_branch
          %36 = sbr.rel (0) target = $region24
        $region23: #{reverse.1} parent=8 // pred_region
          loop: start=0, step=1, limit=1
          $region25: #{reverse.1} parent=23 // loop_pre_header
            _
          $region26: #{reverse.1} parent=23 // loop_header
            %s38 = sphi 0, %s42
            %p39 = scmp.ge.s32.totalorder %s38, 1
            %s43 = sphi %s0, %s0
            %s44 = sphi %s2, %s2
          $region27: #{reverse.1} parent=23 // loop_header_branch
            %41 = sbr.rel (%p39) target = $region31
          $region28: #{reverse.1} parent=23 // loop_body
            %v45 = vld [vmem:[%s43] sm:$0xff]
            %46 = vst [vmem:[%s44] sm:$0xff] %v45
            %v47 = vld [vmem:[%s43 + $0x8] sm:$0xff]
            %48 = vst [vmem:[%s44 + $0x10] sm:$0xff] %v47
            %v49 = vld [vmem:[%s43 + $0x10] sm:$0xff]
            %50 = vst [vmem:[%s44 + $0x20] sm:$0xff] %v49
            %v51 = vld [vmem:[%s43 + $0x18] sm:$0xff]
            %52 = vst [vmem:[%s44 + $0x30] sm:$0xff] %v51
            %v53 = vld [vmem:[%s43 + $0x20] sm:$0xff]
            %54 = vst [vmem:[%s44 + $0x40] sm:$0xff] %v53
            %v55 = vld [vmem:[%s43 + $0x28] sm:$0xff]
            %56 = vst [vmem:[%s44 + $0x50] sm:$0xff] %v55
            %v57 = vld [vmem:[%s43 + $0x30] sm:$0xff]
            %58 = vst [vmem:[%s44 + $0x60] sm:$0xff] %v57
            %v59 = vld [vmem:[%s43 + $0x38] sm:$0xff]
            %60 = vst [vmem:[%s44 + $0x70] sm:$0xff] %v59
          $region29: #{reverse.1} parent=23 // loop_footer
            %s42 = sadd.s32 1, %s38
          $region30: #{reverse.1} parent=23 // loop_footer_branch
            %37 = sbr.rel target = $region26
          $region31: #{reverse.1} parent=23 // loop_exit
            _
        $region24: #{reverse.1} parent=8 // pred_fallthru
          _
        // Predicated region
        $region32: #{reverse.1} parent=8 // pred_check
          _
        $region33: #{reverse.1} parent=8 // pred_check_branch
          %62 = sbr.rel target = $region35
        $region34: #{reverse.1} parent=8 // pred_region
          _
        $region35: #{reverse.1} parent=8 // pred_fallthru
          _
      $region9: #{reverse.1} parent=4 // pred_fallthru
        _
      // Predicated region
      $region10: #{reverse.1} parent=4 // pred_check
        _
      $region11: #{reverse.1} parent=4 // pred_check_branch
        %8 = sbr.rel target = $region13
      $region12: #{reverse.1} parent=4 // pred_region
        %s10 = ssub.s32 256, 1
        loop: start=0, step=1, limit=1
        $region14: #{reverse.1} parent=12 // loop_pre_header
          _
        $region15: #{reverse.1} parent=12 // loop_header
          %s12 = sphi 0, %s16
          %p13 = scmp.ge.s32.totalorder %s12, 1
          %s17 = sphi %s0, %s0
          %s18 = sphi %s2, %s2
        $region16: #{reverse.1} parent=12 // loop_header_branch
          %15 = sbr.rel (%p13) target = $region20
        $region17: #{reverse.1} parent=12 // loop_body
          %v19 = vld [vmem:[%s17] sm:%s10]
          %20 = vst [vmem:[%s18] sm:%s10] %v19
          %v21 = vld [vmem:[%s17 + $0x8] sm:%s10]
          %22 = vst [vmem:[%s18 + $0x10] sm:%s10] %v21
          %v23 = vld [vmem:[%s17 + $0x10] sm:%s10]
          %24 = vst [vmem:[%s18 + $0x20] sm:%s10] %v23
          %v25 = vld [vmem:[%s17 + $0x18] sm:%s10]
          %26 = vst [vmem:[%s18 + $0x30] sm:%s10] %v25
          %v27 = vld [vmem:[%s17 + $0x20] sm:%s10]
          %28 = vst [vmem:[%s18 + $0x40] sm:%s10] %v27
          %v29 = vld [vmem:[%s17 + $0x28] sm:%s10]
          %30 = vst [vmem:[%s18 + $0x50] sm:%s10] %v29
          %v31 = vld [vmem:[%s17 + $0x30] sm:%s10]
          %32 = vst [vmem:[%s18 + $0x60] sm:%s10] %v31
          %v33 = vld [vmem:[%s17 + $0x38] sm:%s10]
          %34 = vst [vmem:[%s18 + $0x70] sm:%s10] %v33
        $region18: #{reverse.1} parent=12 // loop_footer
          %s16 = sadd.s32 1, %s12
        $region19: #{reverse.1} parent=12 // loop_footer_branch
          %11 = sbr.rel target = $region15
        $region20: #{reverse.1} parent=12 // loop_exit
          _
      $region13: #{reverse.1} parent=4 // pred_fallthru
        _
    $region5: #{reverse.1} parent=1 // pred_fallthru
      _
    %63 = vnop
    %s64 = scalar_lea.vmem [#allocation0], 7
    %v65 = vld [vmem:[%s64] ss:$-1 sm:$0xff]
    %v66 = vrot.slane %v65, 1
    %67 = vst [vmem:[#allocation1] sm:$0xff] %v66
    %s68 = scalar_lea.vmem [#allocation0], 8
    %s69 = scalar_lea.vmem %s68, 7 [#allocation0]
    %v70 = vld [vmem:[%s69] ss:$-1 sm:$0xff]
    %v71 = vrot.slane %v70, 1
    %v72 = vlaneseq
    %v73 = vshrl.u32 %v72, 7
    %vm74 = vcmp.lt.s32.totalorder %v73, 7
    %75 = vst.msk [vmem:[#allocation1] sm:$0xff] %vm74, %v71
    %s76 = scalar_lea.vmem [#allocation1], 8
    %s77 = scalar_lea.vmem [#allocation0], 16
    %s78 = scalar_lea.vmem %s77, 7 [#allocation0]
    %v79 = vld [vmem:[%s78] ss:$-1 sm:$0xff]
    %v80 = vrot.slane %v79, 1
    %81 = vst [vmem:[%s76] sm:$0xff] %v80
    %s82 = scalar_lea.vmem %s77, 8 [#allocation0]
    %s83 = scalar_lea.vmem %s82, 7 [#allocation0]
    %v84 = vld [vmem:[%s83] ss:$-1 sm:$0xff]
    %v85 = vrot.slane %v84, 1
    %v86 = vlaneseq
    %v87 = vshrl.u32 %v86, 7
    %vm88 = vcmp.lt.s32.totalorder %v87, 7
    %89 = vst.msk [vmem:[%s76] sm:$0xff] %vm88, %v85
    %s90 = scalar_lea.vmem [#allocation1], 16
    %s91 = scalar_lea.vmem [#allocation0], 32
    %s92 = scalar_lea.vmem %s91, 7 [#allocation0]
    %v93 = vld [vmem:[%s92] ss:$-1 sm:$0xff]
    %v94 = vrot.slane %v93, 1
    %95 = vst [vmem:[%s90] sm:$0xff] %v94
    %s96 = scalar_lea.vmem %s91, 8 [#allocation0]
    %s97 = scalar_lea.vmem %s96, 7 [#allocation0]
    %v98 = vld [vmem:[%s97] ss:$-1 sm:$0xff]
    %v99 = vrot.slane %v98, 1
    %v100 = vlaneseq
    %v101 = vshrl.u32 %v100, 7
    %vm102 = vcmp.lt.s32.totalorder %v101, 7
    %103 = vst.msk [vmem:[%s90] sm:$0xff] %vm102, %v99
    %s104 = scalar_lea.vmem [#allocation1], 24
    %s105 = scalar_lea.vmem [#allocation0], 48
    %s106 = scalar_lea.vmem %s105, 7 [#allocation0]
    %v107 = vld [vmem:[%s106] ss:$-1 sm:$0xff]
    %v108 = vrot.slane %v107, 1
    %109 = vst [vmem:[%s104] sm:$0xff] %v108
    %s110 = scalar_lea.vmem %s105, 8 [#allocation0]
    %s111 = scalar_lea.vmem %s110, 7 [#allocation0]
    %v112 = vld [vmem:[%s111] ss:$-1 sm:$0xff]
    %v113 = vrot.slane %v112, 1
    %v114 = vlaneseq
    %v115 = vshrl.u32 %v114, 7
    %vm116 = vcmp.lt.s32.totalorder %v115, 7
    %117 = vst.msk [vmem:[%s104] sm:$0xff] %vm116, %v113
    %s118 = scalar_lea.vmem [#allocation1], 32
    %s119 = scalar_lea.vmem [#allocation0], 64
    %s120 = scalar_lea.vmem %s119, 7 [#allocation0]
    %v121 = vld [vmem:[%s120] ss:$-1 sm:$0xff]
    %v122 = vrot.slane %v121, 1
    %123 = vst [vmem:[%s118] sm:$0xff] %v122
    %s124 = scalar_lea.vmem %s119, 8 [#allocation0]
    %s125 = scalar_lea.vmem %s124, 7 [#allocation0]
    %v126 = vld [vmem:[%s125] ss:$-1 sm:$0xff]
    %v127 = vrot.slane %v126, 1
    %v128 = vlaneseq
    %v129 = vshrl.u32 %v128, 7
    %vm130 = vcmp.lt.s32.totalorder %v129, 7
    %131 = vst.msk [vmem:[%s118] sm:$0xff] %vm130, %v127
    %s132 = scalar_lea.vmem [#allocation1], 40
    %s133 = scalar_lea.vmem [#allocation0], 80
    %s134 = scalar_lea.vmem %s133, 7 [#allocation0]
    %v135 = vld [vmem:[%s134] ss:$-1 sm:$0xff]
    %v136 = vrot.slane %v135, 1
    %137 = vst [vmem:[%s132] sm:$0xff] %v136
    %s138 = scalar_lea.vmem %s133, 8 [#allocation0]
    %s139 = scalar_lea.vmem %s138, 7 [#allocation0]
    %v140 = vld [vmem:[%s139] ss:$-1 sm:$0xff]
    %v141 = vrot.slane %v140, 1
    %v142 = vlaneseq
    %v143 = vshrl.u32 %v142, 7
    %vm144 = vcmp.lt.s32.totalorder %v143, 7
    %145 = vst.msk [vmem:[%s132] sm:$0xff] %vm144, %v141
    %s146 = scalar_lea.vmem [#allocation1], 48
    %s147 = scalar_lea.vmem [#allocation0], 96
    %s148 = scalar_lea.vmem %s147, 7 [#allocation0]
    %v149 = vld [vmem:[%s148] ss:$-1 sm:$0xff]
    %v150 = vrot.slane %v149, 1
    %151 = vst [vmem:[%s146] sm:$0xff] %v150
    %s152 = scalar_lea.vmem %s147, 8 [#allocation0]
    %s153 = scalar_lea.vmem %s152, 7 [#allocation0]
    %v154 = vld [vmem:[%s153] ss:$-1 sm:$0xff]
    %v155 = vrot.slane %v154, 1
    %v156 = vlaneseq
    %v157 = vshrl.u32 %v156, 7
    %vm158 = vcmp.lt.s32.totalorder %v157, 7
    %159 = vst.msk [vmem:[%s146] sm:$0xff] %vm158, %v155
    %s160 = scalar_lea.vmem [#allocation1], 56
    %s161 = scalar_lea.vmem [#allocation0], 112
    %s162 = scalar_lea.vmem %s161, 7 [#allocation0]
    %v163 = vld [vmem:[%s162] ss:$-1 sm:$0xff]
    %v164 = vrot.slane %v163, 1
    %165 = vst [vmem:[%s160] sm:$0xff] %v164
    %s166 = scalar_lea.vmem %s161, 8 [#allocation0]
    %s167 = scalar_lea.vmem %s166, 7 [#allocation0]
    %v168 = vld [vmem:[%s167] ss:$-1 sm:$0xff]
    %v169 = vrot.slane %v168, 1
    %v170 = vlaneseq
    %v171 = vshrl.u32 %v170, 7
    %vm172 = vcmp.lt.s32.totalorder %v171, 7
    %173 = vst.msk [vmem:[%s160] sm:$0xff] %vm172, %v169
    // Predicated region
    $region36: #{reverse.1} parent=1 // pred_check
      _
    $region37: #{reverse.1} parent=1 // pred_check_branch
      %175 = sbr.rel (0) target = $region39
    $region38: #{reverse.1} parent=1 // pred_region
      // Predicated region
      $region40: #{reverse.1} parent=38 // pred_check
        _
      $region41: #{reverse.1} parent=38 // pred_check_branch
        %177 = sbr.rel (0) target = $region43
      $region42: #{reverse.1} parent=38 // pred_region
        // Predicated region
        $region55: #{reverse.1} parent=42 // pred_check
          _
        $region56: #{reverse.1} parent=42 // pred_check_branch
          %207 = sbr.rel (0) target = $region58
        $region57: #{reverse.1} parent=42 // pred_region
          loop: start=0, step=1, limit=1
          $region59: #{reverse.1} parent=57 // loop_pre_header
            _
          $region60: #{reverse.1} parent=57 // loop_header
            %s209 = sphi 0, %s213
            %p210 = scmp.ge.s32.totalorder %s209, 1
            %s214 = sphi [#allocation1], [#allocation1]
            %s215 = sphi %s1, %s1
          $region61: #{reverse.1} parent=57 // loop_header_branch
            %212 = sbr.rel (%p210) target = $region65
          $region62: #{reverse.1} parent=57 // loop_body
            %v216 = vld [vmem:[%s214] sm:$0xff]
            %217 = vst [vmem:[%s215] sm:$0xff] %v216
            %v218 = vld [vmem:[%s214 + $0x8] sm:$0xff]
            %219 = vst [vmem:[%s215 + $0x8] sm:$0xff] %v218
            %v220 = vld [vmem:[%s214 + $0x10] sm:$0xff]
            %221 = vst [vmem:[%s215 + $0x10] sm:$0xff] %v220
            %v222 = vld [vmem:[%s214 + $0x18] sm:$0xff]
            %223 = vst [vmem:[%s215 + $0x18] sm:$0xff] %v222
            %v224 = vld [vmem:[%s214 + $0x20] sm:$0xff]
            %225 = vst [vmem:[%s215 + $0x20] sm:$0xff] %v224
            %v226 = vld [vmem:[%s214 + $0x28] sm:$0xff]
            %227 = vst [vmem:[%s215 + $0x28] sm:$0xff] %v226
            %v228 = vld [vmem:[%s214 + $0x30] sm:$0xff]
            %229 = vst [vmem:[%s215 + $0x30] sm:$0xff] %v228
            %v230 = vld [vmem:[%s214 + $0x38] sm:$0xff]
            %231 = vst [vmem:[%s215 + $0x38] sm:$0xff] %v230
          $region63: #{reverse.1} parent=57 // loop_footer
            %s213 = sadd.s32 1, %s209
          $region64: #{reverse.1} parent=57 // loop_footer_branch
            %208 = sbr.rel target = $region60
          $region65: #{reverse.1} parent=57 // loop_exit
            _
        $region58: #{reverse.1} parent=42 // pred_fallthru
          _
        // Predicated region
        $region66: #{reverse.1} parent=42 // pred_check
          _
        $region67: #{reverse.1} parent=42 // pred_check_branch
          %233 = sbr.rel target = $region69
        $region68: #{reverse.1} parent=42 // pred_region
          _
        $region69: #{reverse.1} parent=42 // pred_fallthru
          _
      $region43: #{reverse.1} parent=38 // pred_fallthru
        _
      // Predicated region
      $region44: #{reverse.1} parent=38 // pred_check
        _
      $region45: #{reverse.1} parent=38 // pred_check_branch
        %179 = sbr.rel target = $region47
      $region46: #{reverse.1} parent=38 // pred_region
        %s181 = ssub.s32 256, 1
        loop: start=0, step=1, limit=1
        $region48: #{reverse.1} parent=46 // loop_pre_header
          _
        $region49: #{reverse.1} parent=46 // loop_header
          %s183 = sphi 0, %s187
          %p184 = scmp.ge.s32.totalorder %s183, 1
          %s188 = sphi [#allocation1], [#allocation1]
          %s189 = sphi %s1, %s1
        $region50: #{reverse.1} parent=46 // loop_header_branch
          %186 = sbr.rel (%p184) target = $region54
        $region51: #{reverse.1} parent=46 // loop_body
          %v190 = vld [vmem:[%s188] sm:%s181]
          %191 = vst [vmem:[%s189] sm:%s181] %v190
          %v192 = vld [vmem:[%s188 + $0x8] sm:%s181]
          %193 = vst [vmem:[%s189 + $0x8] sm:%s181] %v192
          %v194 = vld [vmem:[%s188 + $0x10] sm:%s181]
          %195 = vst [vmem:[%s189 + $0x10] sm:%s181] %v194
          %v196 = vld [vmem:[%s188 + $0x18] sm:%s181]
          %197 = vst [vmem:[%s189 + $0x18] sm:%s181] %v196
          %v198 = vld [vmem:[%s188 + $0x20] sm:%s181]
          %199 = vst [vmem:[%s189 + $0x20] sm:%s181] %v198
          %v200 = vld [vmem:[%s188 + $0x28] sm:%s181]
          %201 = vst [vmem:[%s189 + $0x28] sm:%s181] %v200
          %v202 = vld [vmem:[%s188 + $0x30] sm:%s181]
          %203 = vst [vmem:[%s189 + $0x30] sm:%s181] %v202
          %v204 = vld [vmem:[%s188 + $0x38] sm:%s181]
          %205 = vst [vmem:[%s189 + $0x38] sm:%s181] %v204
        $region52: #{reverse.1} parent=46 // loop_footer
          %s187 = sadd.s32 1, %s183
        $region53: #{reverse.1} parent=46 // loop_footer_branch
          %182 = sbr.rel target = $region49
        $region54: #{reverse.1} parent=46 // loop_exit
          _
      $region47: #{reverse.1} parent=38 // pred_fallthru
        _
    $region39: #{reverse.1} parent=1 // pred_fallthru
      _
    %234 = vnop

</llo_original>
